<compile_context>
chip_gen: v6e
topology: v6e:2x2x1
jax: 0.10.0
libtpu: 0.0.40
codegen_flags: <defaults>
</compile_context>

<pallas_src>
import math
from functools import partial

import numpy as np
import jax
import jax.numpy as jnp
from jax import lax
from jax.experimental import pallas as pl
from jax.experimental.pallas import tpu as pltpu


def _triple(x):
    if isinstance(x, (tuple, list)):
        assert len(x) == 3
        return tuple(x)
    return (x, x, x)


def _round_up(x, m):
    return (x + m - 1) // m * m


def _cdiv(a, b):
    return -(-a // b)


# ----------------------------- Pallas kernel --------------------------------
def _make_tap_kernel(JT, TH, QWp, Kv, TCp):
    """One grid step = one (n, cp, qt, qh-tile): GEMM (TH*QWp, JT*Kv) x (JT*Kv, TCp).

    refs:
      x_refs[jt] : (TH, QWp, Kv)  compute dtype, H/W taps pre-folded into the lane axis
      w_ref      : (JT, Kv, TCp)  compute dtype, per-T-tap GEMM matrices (phase channels)
      b_ref      : (1, TCp)       f32 bias tiled over phases (zero in pad lanes)
      o_ref      : (TH, QWp, TCp) compute dtype, lane-dense output tile
      acc_ref    : (TH*QWp, TCp)  f32 VMEM accumulator (only present when JT > 1)
    """
    M = TH * QWp
    use_scratch = JT > 1

    def kernel(*refs):
        x_refs = refs[:JT]
        w_ref = refs[JT]
        b_ref = refs[JT + 1]
        o_ref = refs[JT + 2]
        acc_ref = refs[JT + 3] if use_scratch else None

        # All but the last T-tap accumulate into the f32 VMEM scratch.
        for jt in range(JT - 1):
            xs = x_refs[jt][...].reshape(M, Kv)            # tile-aligned: QWp % 8 == 0
            part = jnp.dot(xs, w_ref[jt], preferred_element_type=jnp.float32)
            if jt == 0:
                acc_ref[...] = part
            else:
                acc_ref[...] += part

        xs = x_refs[JT - 1][...].reshape(M, Kv)
        res = jnp.dot(xs, w_ref[JT - 1], preferred_element_type=jnp.float32)
        res = res + b_ref[...]
        if use_scratch:
            res = res + acc_ref[...]
        o_ref[...] = res.reshape(TH, QWp, TCp).astype(o_ref.dtype)

    return kernel


# ----------------------------- functional forward ----------------------------
@partial(jax.jit, static_argnames=("stride", "padding", "compute_dtype"))
def _conv_transpose3d_pallas(x, weight, bias, *, stride, padding,
                             compute_dtype=jnp.bfloat16):
    N, Cin, T, H, W = x.shape
    Cin_w, Cout, kT, kH, kW = weight.shape
    assert Cin == Cin_w
    sT, sH, sW = stride
    pT, pH, pW = padding

    To = (T - 1) * sT - 2 * pT + kT
    Ho = (H - 1) * sH - 2 * pH + kH
    Wo = (W - 1) * sW - 2 * pW + kW

    # ---- sub-pixel (phase) decomposition sizes ----
    JT, JH, JW = _cdiv(kT, sT), _cdiv(kH, sH), _cdiv(kW, sW)   # taps per phase
    kTp, kHp, kWp = JT * sT, JH * sH, JW * sW                  # kernel padded to mult of s
    QT, QH, QW = T + JT - 1, H + JH - 1, W + JW - 1            # stride-1 output extents
    Kv = JH * JW * Cin                                         # folded contraction / T-tap
    n_phase = sT * sH * sW
    Coutp = Cout * n_phase
    Cp = _round_up(Coutp, 128)                                 # lane-dense channel dim

    cdt = jnp.dtype(compute_dtype)
    dts = cdt.itemsize

    # ---- tiling: QW padded to sublane multiple, TH output-H rows fused, Cp tiled ----
    QWp = _round_up(QW, 8)
    TCp = next(c for c in (512, 384, 256, 128) if Cp % c == 0)
    TH = min(QH, max(1, 256 // QWp))                           # target M ~ 256 rows

    def vmem_est(th, tcp):
        m = th * QWp
        return (JT * 2 * m * Kv * dts              # input views, double-buffered
                + 2 * JT * Kv * tcp * dts          # weight block, double-buffered
                + 2 * tcp * 4                      # bias block
                + 2 * m * tcp * dts                # output block
                + (m * tcp * 4 if JT > 1 else 0))  # f32 accumulator scratch

    BUDGET = 40 * 1024 * 1024                      # fits every TPU generation (v7x: 64 MiB)
    while vmem_est(TH, TCp) > BUDGET and (TH > 1 or TCp > 128):
        if TH > 1:
            TH = max(1, TH // 2)
        else:
            TCp = next(c for c in (384, 256, 128) if c < TCp and Cp % c == 0)

    nH = _cdiv(QH, TH)
    TH = _cdiv(QH, nH)                             # re-balance: rounded QHp wastes < nH rows
    QHp = nH * TH
    NCP = Cp // TCp
    M = TH * QWp

    # ---- pack weight: per-T-tap (Kv, Cp) GEMM matrices (tiny, wrapper-side) ----
    # W[ci, co, kt, kh, kw], kt = jt*sT + rt etc.; reverse the tap index (correlation form)
    # and move the phases (rt, rh, rw) into the output-channel axis; fold (jh, jw, ci)
    # into the contraction axis so they land in the lane dim of the GEMM.
    wpad = jnp.pad(weight, ((0, 0), (0, 0),
                            (0, kTp - kT), (0, kHp - kH), (0, kWp - kW)))
    w8 = wpad.reshape(Cin, Cout, JT, sT, JH, sH, JW, sW)
    w8 = jnp.flip(w8, axis=(2, 4, 6))                          # reverse jt, jh, jw
    w8 = jnp.transpose(w8, (2, 4, 6, 0, 3, 5, 7, 1))           # (jt,jh,jw,ci, rt,rh,rw,co)
    wk = w8.reshape(JT, Kv, Coutp)
    wk = jnp.pad(wk, ((0, 0), (0, 0), (0, Cp - Coutp))).astype(compute_dtype)

    bk = jnp.tile(bias, n_phase)                               # bias per phase channel
    bk = jnp.pad(bk, (0, Cp - Coutp)).reshape(1, Cp).astype(jnp.float32)

    # ---- input: NCDHW -> channels-last, halo pad, fold (jh, jw) taps into lanes ----
    xcl = jnp.transpose(x.astype(compute_dtype), (0, 2, 3, 4, 1))     # (N, T, H, W, Cin)
    Tz = QT + JT - 1
    xz = jnp.pad(xcl, ((0, 0),
                       (JT - 1, JT - 1),
                       (JH - 1, JH - 1 + QHp - QH),
                       (JW - 1, JW - 1 + QWp - QW),
                       (0, 0)))                    # (N, Tz, QHp+JH-1, QWp+JW-1, Cin)
    parts = []
    for jh in range(JH):
        for jw in range(JW):
            parts.append(xz[:, :, jh:jh + QHp, jw:jw + QWp, :])
    xf = jnp.concatenate(parts, axis=-1) if len(parts) > 1 else parts[0]
    # xf: (N, Tz, QHp, QWp, Kv)  -- JH*JW x input-sized, lane-packed im2col-lite

    # ---- BlockSpecs: JT shifted views of xf handle the remaining T-tap offsets ----
    in_specs = []
    for jt in range(JT):
        in_specs.append(pl.BlockSpec(
            (None, None, TH, QWp, Kv),
            lambda n, cp, qt, qh, _jt=jt: (n, qt + _jt, qh, 0, 0)))
    # Weight / bias are indexed only by the cp grid axis -> re-DMA'd only when cp changes.
    # TODO(synk): single-buffer these (pipeline_mode=pl.Buffered(1)) to halve their VMEM;
    # the Cp tiling already bounds the resident block, so this is a minor follow-up.
    in_specs.append(pl.BlockSpec((JT, Kv, TCp), lambda n, cp, qt, qh: (0, 0, cp)))
    in_specs.append(pl.BlockSpec((1, TCp), lambda n, cp, qt, qh: (0, cp)))
    out_spec = pl.BlockSpec((None, None, TH, QWp, TCp),
                            lambda n, cp, qt, qh: (n, qt, qh, 0, cp))

    scratch_shapes = [pltpu.VMEM((M, TCp), jnp.float32)] if JT > 1 else []

    est = vmem_est(TH, TCp)
    vmem_limit = int(min(64 * 1024 * 1024, max(32 * 1024 * 1024, 2 * est)))

    flops = 2 * N * QT * QHp * QWp * (JT * Kv) * Cp
    bytes_accessed = (JT * NCP * N * Tz * QHp * QWp * Kv * dts   # input reads
                      + N * NCP * JT * Kv * TCp * dts            # weight reads
                      + N * QT * QHp * QWp * Cp * dts            # output writes
                      + NCP * Cp * 4)                            # bias reads
    cost = pl.CostEstimate(flops=int(flops), transcendentals=0,
                           bytes_accessed=int(bytes_accessed))

    # TODO(synk): for very large Cin, add a trailing "arbitrary" grid axis tiling the
    # folded Kv axis (Cin-major fold) with pl.when init/finalize on the f32 accumulator.
    # TODO(synk): on v7x with N == 1, reorder the grid so a large parallel axis (qt) is
    # outermost for 2-TensorCore sharding.
    out = pl.pallas_call(
        _make_tap_kernel(JT, TH, QWp, Kv, TCp),
        out_shape=jax.ShapeDtypeStruct((N, QT, QHp, QWp, Cp), compute_dtype),
        grid_spec=pltpu.PrefetchScalarGridSpec(
            num_scalar_prefetch=0,
            grid=(N, NCP, QT, nH),
            in_specs=in_specs,
            out_specs=out_spec,
            scratch_shapes=scratch_shapes),
        compiler_params=pltpu.CompilerParams(
            dimension_semantics=("parallel", "parallel", "parallel", "parallel"),
            vmem_limit_bytes=vmem_limit),
        cost_estimate=cost,
    )(*([xf] * JT), wk, bk)

    # ---- epilogue: crop pads FIRST, then depth-to-space in the compute dtype ----
    # TODO(synk): the strided phase scatter cannot be expressed as a contiguous out_spec
    # block, so this one output-sized shuffle stays in XLA.
    o = out[:, :, :QH, :QW, :Coutp]
    o = o.reshape(N, QT, QH, QW, sT, sH, sW, Cout)
    o = jnp.transpose(o, (0, 7, 1, 4, 2, 5, 3, 6))
    o = o.reshape(N, Cout, QT * sT, QH * sH, QW * sW)
    o = o[:, :, pT:pT + To, pH:pH + Ho, pW:pW + Wo]
    return o.astype(jnp.float32)


# ----------------------------- Module wrapper --------------------------------
class ConvTranspose3dPallas:
    """JAX/Pallas re-implementation of torch.nn.ConvTranspose3d forward.

    compute_dtype=jnp.bfloat16 gives the fast path; pass jnp.float32 for bit-closer
    parity with PyTorch's f32 kernel.
    """

    def __init__(self, in_channels, out_channels, kernel_size, stride=1,
                 padding=0, *, key, compute_dtype=jnp.bfloat16):
        self.in_channels = in_channels
        self.out_channels = out_channels
        self.kt, self.kh, self.kw = _triple(kernel_size)
        self.dt, self.dh, self.dw = _triple(stride)
        self.padt, self.padh, self.padw = _triple(padding)
        self.compute_dtype = compute_dtype

        # reset_parameters(): uniform(-stdv, stdv), stdv = 1/sqrt(kT*kH*kW*C_in)
        stdv = 1.0 / math.sqrt(self.kt * self.kh * self.kw * in_channels)
        kw_, kb_ = jax.random.split(key)
        self.weight = jax.random.uniform(
            kw_, (in_channels, out_channels, self.kt, self.kh, self.kw),
            minval=-stdv, maxval=stdv, dtype=jnp.float32)
        self.bias = jax.random.uniform(
            kb_, (out_channels,), minval=-stdv, maxval=stdv, dtype=jnp.float32)

    def __call__(self, x):
        return _conv_transpose3d_pallas(
            x, self.weight, self.bias,
            stride=(self.dt, self.dh, self.dw),
            padding=(self.padt, self.padh, self.padw),
            compute_dtype=self.compute_dtype)


# ----------------------------- reference (pure JAX, f32) ----------------------
def _reference_conv_transpose3d(x, w, b, stride, padding):
    sT, sH, sW = stride
    pT, pH, pW = padding
    Cin, Cout, kT, kH, kW = w.shape
    w_rot = jnp.transpose(jnp.flip(w, axis=(2, 3, 4)), (1, 0, 2, 3, 4))
    y = lax.conv_general_dilated(
        x, w_rot,
        window_strides=(1, 1, 1),
        padding=((kT - 1 - pT, kT - 1 - pT),
                 (kH - 1 - pH, kH - 1 - pH),
                 (kW - 1 - pW, kW - 1 - pW)),
        lhs_dilation=(sT, sH, sW),
        rhs_dilation=(1, 1, 1),
        dimension_numbers=("NCDHW", "OIDHW", "NCDHW"))
    return y + b.reshape(1, Cout, 1, 1, 1)


if __name__ == "__main__":
    key = jax.random.PRNGKey(0)
    k_param, k_x, key = jax.random.split(key, 3)

    # tolerance for the bf16 compute stream (inputs/weights/stores in bf16, f32 accum)
    TOL = 4e-2

    # --- config 1: cubic kernel, stride 2, padding 1 ---
    N, Cin, Cout = 2, 4, 5
    T, H, W = 4, 5, 6
    m = ConvTranspose3dPallas(Cin, Cout, 3, stride=2, padding=1, key=k_param)
    x = jax.random.normal(k_x, (N, Cin, T, H, W), dtype=jnp.float32)

    y = jax.block_until_ready(m(x))
    y_ref = jax.block_until_ready(_reference_conv_transpose3d(
        x, m.weight, m.bias, _triple(2), _triple(1)))
    assert y.shape == y_ref.shape == (N, Cout, 7, 9, 11), y.shape
    err = float(np.max(np.abs(np.asarray(y) - np.asarray(y_ref))))
    assert np.allclose(np.asarray(y), np.asarray(y_ref), atol=TOL, rtol=TOL), err

    # --- config 2: non-cubic kernel/stride, incl. kernel < stride and stride 1 dims ---
    k_param2, k_x2 = jax.random.split(key)
    m2 = ConvTranspose3dPallas(Cin, Cout, (3, 2, 3), stride=(2, 3, 1),
                               padding=(1, 0, 1), key=k_param2)
    x2 = jax.random.normal(k_x2, (N, Cin, T, H, W), dtype=jnp.float32)
    y2 = jax.block_until_ready(m2(x2))
    y2_ref = jax.block_until_ready(_reference_conv_transpose3d(
        x2, m2.weight, m2.bias, (2, 3, 1), (1, 0, 1)))
    assert y2.shape == y2_ref.shape == (N, Cout, 7, 14, 6), y2.shape
    err2 = float(np.max(np.abs(np.asarray(y2) - np.asarray(y2_ref))))
    assert np.allclose(np.asarray(y2), np.asarray(y2_ref), atol=TOL, rtol=TOL), err2

    print("KERNEL_OK")
</pallas_src>

<mosaic_0001>
module attributes {stable_mosaic.version = 11 : i64} {
  func.func @kernel(%arg0: i32, %arg1: i32, %arg2: i32, %arg3: i32, %arg4: memref<1x1x6x8x16xbf16, #tpu.memory_space<vmem>>, %arg5: memref<1x1x6x8x16xbf16, #tpu.memory_space<vmem>>, %arg6: memref<2x16x128xbf16, #tpu.memory_space<vmem>>, %arg7: memref<1x128xf32, #tpu.memory_space<vmem>>, %arg8: memref<1x1x6x8x128xbf16, #tpu.memory_space<vmem>>, %arg9: memref<48x128xf32, #tpu.memory_space<vmem>>) attributes {dimension_semantics = [#tpu.dimension_semantics<parallel>, #tpu.dimension_semantics<parallel>, #tpu.dimension_semantics<parallel>, #tpu.dimension_semantics<parallel>], iteration_bounds = array<i64: 2, 1, 5, 1>, scalar_prefetch = 0 : i64, scratch_operands = 1 : i64, tpu.core_type = #tpu.core_type<tc>, window_params = [{transform_indices = @transform_0, window_bounds = array<i64: 1, 1, 6, 8, 16>}, {transform_indices = @transform_1, window_bounds = array<i64: 1, 1, 6, 8, 16>}, {transform_indices = @transform_2, window_bounds = array<i64: 2, 16, 128>}, {transform_indices = @transform_3, window_bounds = array<i64: 1, 128>}, {transform_indices = @transform_4, window_bounds = array<i64: 1, 1, 6, 8, 128>}]} {
    %c0 = arith.constant 0 : index
    %c0_0 = arith.constant 0 : index
    %c0_1 = arith.constant 0 : index
    %c0_2 = arith.constant 0 : index
    %c0_3 = arith.constant 0 : index
    %0 = vector.load %arg4[%c0, %c0_0, %c0_1, %c0_2, %c0_3] : memref<1x1x6x8x16xbf16, #tpu.memory_space<vmem>>, vector<1x1x6x8x16xbf16>
    %1 = vector.shape_cast %0 : vector<1x1x6x8x16xbf16> to vector<6x8x16xbf16>
    %2 = vector.shape_cast %1 : vector<6x8x16xbf16> to vector<48x16xbf16>
    %c0_4 = arith.constant 0 : index
    %c0_5 = arith.constant 0 : index
    %c0_6 = arith.constant 0 : index
    %3 = vector.load %arg6[%c0_4, %c0_5, %c0_6] : memref<2x16x128xbf16, #tpu.memory_space<vmem>>, vector<1x16x128xbf16>
    %4 = vector.shape_cast %3 : vector<1x16x128xbf16> to vector<16x128xbf16>
    %cst = arith.constant dense<0.000000e+00> : vector<48x128xf32>
    %5 = tpu.matmul %2, %4, %cst {dimension_numbers = #tpu.dot_dimension_numbers<[1], [0], [0], [1], [0, 0, 1, 1], [], []>} : vector<48x16xbf16>, vector<16x128xbf16>, vector<48x128xf32> -> vector<48x128xf32>
    %c0_7 = arith.constant 0 : index
    %c0_8 = arith.constant 0 : index
    %6 = vector.load %arg9[%c0_7, %c0_8] : memref<48x128xf32, #tpu.memory_space<vmem>>, vector<48x128xf32>
    tpu.vector_store %arg9[%c0_7, %c0_8], %5 {strides = array<i32>} : memref<48x128xf32, #tpu.memory_space<vmem>>, vector<48x128xf32>,
    %c0_9 = arith.constant 0 : index
    %c0_10 = arith.constant 0 : index
    %c0_11 = arith.constant 0 : index
    %c0_12 = arith.constant 0 : index
    %c0_13 = arith.constant 0 : index
    %7 = vector.load %arg5[%c0_9, %c0_10, %c0_11, %c0_12, %c0_13] : memref<1x1x6x8x16xbf16, #tpu.memory_space<vmem>>, vector<1x1x6x8x16xbf16>
    %8 = vector.shape_cast %7 : vector<1x1x6x8x16xbf16> to vector<6x8x16xbf16>
    %9 = vector.shape_cast %8 : vector<6x8x16xbf16> to vector<48x16xbf16>
    %c1 = arith.constant 1 : index
    %c0_14 = arith.constant 0 : index
    %c0_15 = arith.constant 0 : index
    %10 = vector.load %arg6[%c1, %c0_14, %c0_15] : memref<2x16x128xbf16, #tpu.memory_space<vmem>>, vector<1x16x128xbf16>
    %11 = vector.shape_cast %10 : vector<1x16x128xbf16> to vector<16x128xbf16>
    %cst_16 = arith.constant dense<0.000000e+00> : vector<48x128xf32>
    %12 = tpu.matmul %9, %11, %cst_16 {dimension_numbers = #tpu.dot_dimension_numbers<[1], [0], [0], [1], [0, 0, 1, 1], [], []>} : vector<48x16xbf16>, vector<16x128xbf16>, vector<48x128xf32> -> vector<48x128xf32>
    %c0_17 = arith.constant 0 : index
    %c0_18 = arith.constant 0 : index
    %13 = vector.load %arg7[%c0_17, %c0_18] : memref<1x128xf32, #tpu.memory_space<vmem>>, vector<1x128xf32>
    %14 = vector.broadcast %13 : vector<1x128xf32> to vector<48x128xf32>
    %15 = arith.addf %12, %14 : vector<48x128xf32>
    %c0_19 = arith.constant 0 : index
    %c0_20 = arith.constant 0 : index
    %16 = vector.load %arg9[%c0_19, %c0_20] : memref<48x128xf32, #tpu.memory_space<vmem>>, vector<48x128xf32>
    %17 = arith.addf %15, %16 : vector<48x128xf32>
    %18 = vector.shape_cast %17 : vector<48x128xf32> to vector<6x8x128xf32>
    %19 = arith.truncf %18 : vector<6x8x128xf32> to vector<6x8x128xbf16>
    %c0_21 = arith.constant 0 : index
    %c0_22 = arith.constant 0 : index
    %c0_23 = arith.constant 0 : index
    %c0_24 = arith.constant 0 : index
    %c0_25 = arith.constant 0 : index
    %20 = vector.load %arg8[%c0_21, %c0_22, %c0_23, %c0_24, %c0_25] : memref<1x1x6x8x128xbf16, #tpu.memory_space<vmem>>, vector<1x1x6x8x128xbf16>
    %21 = vector.shape_cast %20 : vector<1x1x6x8x128xbf16> to vector<6x8x128xbf16>
    %22 = vector.shape_cast %19 : vector<6x8x128xbf16> to vector<1x1x6x8x128xbf16>
    tpu.vector_store %arg8[%c0_21, %c0_22, %c0_23, %c0_24, %c0_25], %22 {strides = array<i32>} : memref<1x1x6x8x128xbf16, #tpu.memory_space<vmem>>, vector<1x1x6x8x128xbf16>,
    return
  }
  func.func @transform_0(%arg0: i32, %arg1: i32, %arg2: i32, %arg3: i32) -> (i32, i32, i32, i32, i32) {
    %c0_i32 = arith.constant 0 : i32
    %0 = arith.addi %arg2, %c0_i32 : i32
    %c0_i32_0 = arith.constant 0 : i32
    %c0_i32_1 = arith.constant 0 : i32
    %c0_i32_2 = arith.constant 0 : i32
    return %arg0, %0, %arg3, %c0_i32_0, %c0_i32_1 : i32, i32, i32, i32, i32
  }
  func.func @transform_1(%arg0: i32, %arg1: i32, %arg2: i32, %arg3: i32) -> (i32, i32, i32, i32, i32) {
    %c1_i32 = arith.constant 1 : i32
    %0 = arith.addi %arg2, %c1_i32 : i32
    %c0_i32 = arith.constant 0 : i32
    %c0_i32_0 = arith.constant 0 : i32
    %c0_i32_1 = arith.constant 0 : i32
    return %arg0, %0, %arg3, %c0_i32, %c0_i32_0 : i32, i32, i32, i32, i32
  }
  func.func @transform_2(%arg0: i32, %arg1: i32, %arg2: i32, %arg3: i32) -> (i32, i32, i32) {
    %c0_i32 = arith.constant 0 : i32
    %c0_i32_0 = arith.constant 0 : i32
    %c0_i32_1 = arith.constant 0 : i32
    return %c0_i32, %c0_i32_0, %arg1 : i32, i32, i32
  }
  func.func @transform_3(%arg0: i32, %arg1: i32, %arg2: i32, %arg3: i32) -> (i32, i32) {
    %c0_i32 = arith.constant 0 : i32
    %c0_i32_0 = arith.constant 0 : i32
    return %c0_i32, %arg1 : i32, i32
  }
  func.func @transform_4(%arg0: i32, %arg1: i32, %arg2: i32, %arg3: i32) -> (i32, i32, i32, i32, i32) {
    %c0_i32 = arith.constant 0 : i32
    %c0_i32_0 = arith.constant 0 : i32
    return %arg0, %arg2, %arg3, %c0_i32, %arg1 : i32, i32, i32, i32, i32
  }
}

</mosaic_0001>

<llo_original>
// kernel: tile.8
$region0: #{tile.8}
  #allocation0 [shape = 's32[1]{0}', space=sflag, size = 0x4, scoped, tag = 'scoped memory for tile.8']
  %s0 = inlined_call_operand.vmem [shape: f32[5], index: 0, kind: input, shape index: {}]
  %s1 = inlined_call_operand.vmem [shape: f32[8,5], index: 1, kind: output, shape index: {}]
  // Predicated region
  $region2: #{tile.8} parent=0 // pred_check
    _
  $region3: #{tile.8} parent=0 // pred_check_branch
    %3 = sbr.rel (0) target = $region5
  $region4: #{tile.8} parent=0 // pred_region
    _
  $region5: #{tile.8} parent=0 // pred_fallthru
    _
  %v4 = vld [vmem:[%s0] ss:$0 sm:$0xff]
  %5 = vst [vmem:[%s1] sm:$0xff] %v4

// kernel: tile.9
$region0: #{tile.9}
  %s0 = inlined_call_operand.vmem [shape: f32[8,5], index: 0, kind: input, shape index: {}]
  %s1 = inlined_call_operand.vmem [shape: f32[40], index: 1, kind: output, shape index: {}]
  $region1: #{tile.9} parent=0
    #allocation0 [shape = 'u8[4096]{0}', space=vmem, size = 0x1000, scoped, tag = 'scoped mem for output reshape']
    %v2 = vld [vmem:[%s0] sm:$0x1]
    %vm3 = vcmask 39936
    %4 = vst.msk [vmem:[#allocation0] sm:$0x1] %vm3, %v2
    %s5 = scalar_lea.vmem %s0, 7
    %v6 = vld [vmem:[%s5] sm:$0x1]
    %7 = vrot.lane.b32.xlu0 %v6, 35
    %v8 = vpop.permute.xlu0 %7
    %vm9 = vcmask 326936
    %10 = vst.msk [vmem:[#allocation0] sm:$0x1] %vm9, %v8
    %s11 = scalar_lea.vmem %s0, 6
    %v12 = vld [vmem:[%s11] sm:$0x1]
    %13 = vrot.lane.b32.xlu0 %v12, 30
    %v14 = vpop.permute.xlu0 %13
    %vm15 = vcmask 285936
    %16 = vst.msk [vmem:[#allocation0] sm:$0x1] %vm15, %v14
    %s17 = scalar_lea.vmem %s0, 5
    %v18 = vld [vmem:[%s17] sm:$0x1]
    %19 = vrot.lane.b32.xlu0 %v18, 25
    %v20 = vpop.permute.xlu0 %19
    %vm21 = vcmask 244936
    %22 = vst.msk [vmem:[#allocation0] sm:$0x1] %vm21, %v20
    %s23 = scalar_lea.vmem %s0, 4
    %v24 = vld [vmem:[%s23] sm:$0x1]
    %25 = vrot.lane.b32.xlu0 %v24, 20
    %v26 = vpop.permute.xlu0 %25
    %vm27 = vcmask 203936
    %28 = vst.msk [vmem:[#allocation0] sm:$0x1] %vm27, %v26
    %s29 = scalar_lea.vmem %s0, 3
    %v30 = vld [vmem:[%s29] sm:$0x1]
    %31 = vrot.lane.b32.xlu0 %v30, 15
    %v32 = vpop.permute.xlu0 %31
    %vm33 = vcmask 162936
    %34 = vst.msk [vmem:[#allocation0] sm:$0x1] %vm33, %v32
    %s35 = scalar_lea.vmem %s0, 2
    %v36 = vld [vmem:[%s35] sm:$0x1]
    %37 = vrot.lane.b32.xlu0 %v36, 10
    %v38 = vpop.permute.xlu0 %37
    %vm39 = vcmask 121936
    %40 = vst.msk [vmem:[#allocation0] sm:$0x1] %vm39, %v38
    %s41 = scalar_lea.vmem %s0, 1
    %v42 = vld [vmem:[%s41] sm:$0x1]
    %43 = vrot.lane.b32.xlu0 %v42, 5
    %v44 = vpop.permute.xlu0 %43
    %vm45 = vcmask 80936
    %46 = vst.msk [vmem:[#allocation0] sm:$0x1] %vm45, %v44
    %s48 = sshll.u32 1, 1
    %s49 = ssub.s32 %s48, 1
    %v51 = vld [vmem:[#allocation0] sm:%s49]
    %s52 = sshll.u32 1, 1
    %s53 = ssub.s32 %s52, 1
    %54 = vst [vmem:[%s1] sm:%s53] %v51

// kernel: _conv_transpose3d_pallas.1
$region0: #{_conv_transpose3d_pallas.1}
  #allocation0 [shape = 'u32[]', space=smem, size = 0x4, offset = 0x4, fixed_abs, tag = 'smem constant byte address 0x4 - core index']
  #allocation1 [shape = 'u32[144,128]{1,0:T(1,128)}', space=vmem, size = 0x12000, scoped, tag = 'internal scratch']
  #allocation2 [shape = 'f32[48,128]{1,0:T(8,128)}', space=vmem, size = 0x6000, scoped, tag = 'scratch operand']
  %s0 = inlined_call_operand.vmem [shape: bf16[2,6,6,8,16], index: 0, kind: input, shape index: {}, may-alias: {0,1}]
  %s1 = inlined_call_operand.vmem [shape: bf16[2,6,6,8,16], index: 1, kind: input, shape index: {}, may-alias: {0,1}]
  %s2 = inlined_call_operand.vmem [shape: bf16[2,16,128], index: 2, kind: input, shape index: {}]
  %s3 = inlined_call_operand.vmem [shape: f32[1,128], index: 3, kind: input, shape index: {}]
  %s4 = inlined_call_operand.vmem [shape: bf16[2,5,6,8,128], index: 4, kind: output, shape index: {}]
  %s5 = sld [smem:[#allocation0]]
  $region49: #{_conv_transpose3d_pallas.1} parent=0
    _
  %s7 = ssub.s32 1, %s5
  %s8 = scalar_select 0, %s7, %s5
  loop: start=0, step=1, limit=12
  $region2: #{_conv_transpose3d_pallas.1} parent=0 // loop_pre_header
    _
  $region3: #{_conv_transpose3d_pallas.1} parent=0 // loop_header
    %s10 = sphi 0, %s14
    %p11 = scmp.ge.s32.totalorder %s10, 12
    %s17 = sphi 0, %s43
    %s18 = sphi 0, %s39
    %s19 = sphi 0, %s35
    %s20 = sphi 0, %s31
    %s21 = sphi 0, %s17
    %s22 = sphi 0, %s18
    %s23 = sphi 0, %s19
    %s24 = sphi 0, %s20
    %s25 = sphi 0, %s21
    %s26 = sphi 0, %s22
    %s27 = sphi 0, %s23
    %s28 = sphi 0, %s24
    %s50 = sphi 0, %s52
    %s53 = sphi 0, %s50
    %s54 = sphi 0, %s53
    %s70 = sphi 0, %s54
    %s82 = sphi 0, %s84
    %s85 = sphi 0, %s82
    %s86 = sphi 0, %s85
    %s102 = sphi 0, %s86
    %s108 = sphi 0, %s110
    %s111 = sphi 0, %s108
    %s112 = sphi 0, %s111
    %s128 = sphi 0, %s112
    %s134 = sphi 0, %s136
    %s137 = sphi 0, %s134
    %s138 = sphi 0, %s137
    %s154 = sphi 0, %s138
    %s166 = sphi 0, %s168
    %s169 = sphi 0, %s166
    %s170 = sphi 0, %s169
    %s186 = sphi 0, %s170
  $region4: #{_conv_transpose3d_pallas.1} parent=0 // loop_header_branch
    %13 = sbr.rel (%p11) target = $region8
  $region5: #{_conv_transpose3d_pallas.1} parent=0 // loop_body
    %s15 = ssub.s32 %s10, 1
    %s16 = ssub.s32 %s10, 2
    %s29 = sadd.s32 1, %s20
    %p30 = scmp.ge.s32.totalorder %s29, 1
    %s31 = scalar_select %p30, 0, %s29
    %s32 = sadd.s32 1, %s19
    %s33 = scalar_select %p30, %s32, %s19
    %p34 = scmp.ge.s32.totalorder %s33, 5
    %s35 = scalar_select %p34, 0, %s33
    %s36 = sadd.s32 1, %s18
    %s37 = scalar_select %p34, %s36, %s18
    %p38 = scmp.ge.s32.totalorder %s37, 1
    %s39 = scalar_select %p38, 0, %s37
    %s40 = sadd.s32 1, %s17
    %s41 = scalar_select %p38, %s40, %s17
    %p42 = scmp.ge.s32.totalorder %s41, 2
    %s43 = scalar_select %p42, 0, %s41
    %s44 = ssub.s32 %s17, %s43
    %s45 = ssub.s32 %s19, %s35
    %s46 = sor.u32 %s44, %s45
    %s47 = ssub.s32 %s20, %s31
    %s48 = sor.u32 %s46, %s47
    %p49 = scmp.eq.s32.totalorder %s48, 0
    %s51 = sadd.s32 %s50, 1
    %s52 = scalar_select %p49, %s50, %s51
    %p55 = pneg %p49
    %p56 = scmp.eq.s32.totalorder %s10, 9
    %p57 = por %p55, %p56
    %p58 = scmp.ne.s32.totalorder %s50, %s53
    %p59 = scmp.eq.s32.totalorder %s10, 0
    %p60 = por %p58, %p59
    %p61 = scmp.ne.s32.totalorder %s50, %s53
    %p62 = scmp.eq.s32.totalorder %s15, 9
    %p63 = por %p61, %p62
    %p64 = scmp.ne.s32.totalorder %s53, %s54
    %p65 = scmp.eq.s32.totalorder %s15, 0
    %p66 = por %p64, %p65
    %p67 = scmp.ne.s32.totalorder %s53, %s54
    %p68 = scmp.eq.s32.totalorder %s16, 9
    %p69 = por %p67, %p68
    %p71 = scmp.ne.s32.totalorder %s54, %s70
    %p72 = scmp.eq.s32.totalorder %s16, 0
    %p73 = por %p71, %p72
    %s74 = sadd.s32 %s19, 1
    %s75 = sadd.s32 %s35, 1
    %s76 = ssub.s32 %s17, %s43
    %s77 = ssub.s32 %s74, %s75
    %s78 = sor.u32 %s76, %s77
    %s79 = ssub.s32 %s20, %s31
    %s80 = sor.u32 %s78, %s79
    %p81 = scmp.eq.s32.totalorder %s80, 0
    %s83 = sadd.s32 %s82, 1
    %s84 = scalar_select %p81, %s82, %s83
    %p87 = pneg %p81
    %p88 = scmp.eq.s32.totalorder %s10, 9
    %p89 = por %p87, %p88
    %p90 = scmp.ne.s32.totalorder %s82, %s85
    %p91 = scmp.eq.s32.totalorder %s10, 0
    %p92 = por %p90, %p91
    %p93 = scmp.ne.s32.totalorder %s82, %s85
    %p94 = scmp.eq.s32.totalorder %s15, 9
    %p95 = por %p93, %p94
    %p96 = scmp.ne.s32.totalorder %s85, %s86
    %p97 = scmp.eq.s32.totalorder %s15, 0
    %p98 = por %p96, %p97
    %p99 = scmp.ne.s32.totalorder %s85, %s86
    %p100 = scmp.eq.s32.totalorder %s16, 9
    %p101 = por %p99, %p100
    %p103 = scmp.ne.s32.totalorder %s86, %s102
    %p104 = scmp.eq.s32.totalorder %s16, 0
    %p105 = por %p103, %p104
    %s106 = ssub.s32 %s18, %s39
    %p107 = scmp.eq.s32.totalorder %s106, 0
    %s109 = sadd.s32 %s108, 1
    %s110 = scalar_select %p107, %s108, %s109
    %p113 = pneg %p107
    %p114 = scmp.eq.s32.totalorder %s10, 9
    %p115 = por %p113, %p114
    %p116 = scmp.ne.s32.totalorder %s108, %s111
    %p117 = scmp.eq.s32.totalorder %s10, 0
    %p118 = por %p116, %p117
    %p119 = scmp.ne.s32.totalorder %s108, %s111
    %p120 = scmp.eq.s32.totalorder %s15, 9
    %p121 = por %p119, %p120
    %p122 = scmp.ne.s32.totalorder %s111, %s112
    %p123 = scmp.eq.s32.totalorder %s15, 0
    %p124 = por %p122, %p123
    %p125 = scmp.ne.s32.totalorder %s111, %s112
    %p126 = scmp.eq.s32.totalorder %s16, 9
    %p127 = por %p125, %p126
    %p129 = scmp.ne.s32.totalorder %s112, %s128
    %p130 = scmp.eq.s32.totalorder %s16, 0
    %p131 = por %p129, %p130
    %s132 = ssub.s32 %s18, %s39
    %p133 = scmp.eq.s32.totalorder %s132, 0
    %s135 = sadd.s32 %s134, 1
    %s136 = scalar_select %p133, %s134, %s135
    %p139 = pneg %p133
    %p140 = scmp.eq.s32.totalorder %s10, 9
    %p141 = por %p139, %p140
    %p142 = scmp.ne.s32.totalorder %s134, %s137
    %p143 = scmp.eq.s32.totalorder %s10, 0
    %p144 = por %p142, %p143
    %p145 = scmp.ne.s32.totalorder %s134, %s137
    %p146 = scmp.eq.s32.totalorder %s15, 9
    %p147 = por %p145, %p146
    %p148 = scmp.ne.s32.totalorder %s137, %s138
    %p149 = scmp.eq.s32.totalorder %s15, 0
    %p150 = por %p148, %p149
    %p151 = scmp.ne.s32.totalorder %s137, %s138
    %p152 = scmp.eq.s32.totalorder %s16, 9
    %p153 = por %p151, %p152
    %p155 = scmp.ne.s32.totalorder %s138, %s154
    %p156 = scmp.eq.s32.totalorder %s16, 0
    %p157 = por %p155, %p156
    %s158 = ssub.s32 %s17, %s43
    %s159 = ssub.s32 %s19, %s35
    %s160 = sor.u32 %s158, %s159
    %s161 = ssub.s32 %s20, %s31
    %s162 = sor.u32 %s160, %s161
    %s163 = ssub.s32 %s18, %s39
    %s164 = sor.u32 %s162, %s163
    %p165 = scmp.eq.s32.totalorder %s164, 0
    %s167 = sadd.s32 %s166, 1
    %s168 = scalar_select %p165, %s166, %s167
    %p171 = pneg %p165
    %p172 = scmp.eq.s32.totalorder %s10, 9
    %p173 = por %p171, %p172
    %p174 = scmp.ne.s32.totalorder %s166, %s169
    %p175 = scmp.eq.s32.totalorder %s10, 0
    %p176 = por %p174, %p175
    %p177 = scmp.ne.s32.totalorder %s166, %s169
    %p178 = scmp.eq.s32.totalorder %s15, 9
    %p179 = por %p177, %p178
    %p180 = scmp.ne.s32.totalorder %s169, %s170
    %p181 = scmp.eq.s32.totalorder %s15, 0
    %p182 = por %p180, %p181
    %p183 = scmp.ne.s32.totalorder %s169, %s170
    %p184 = scmp.eq.s32.totalorder %s16, 9
    %p185 = por %p183, %p184
    %p187 = scmp.ne.s32.totalorder %s170, %s186
    %p188 = scmp.eq.s32.totalorder %s16, 0
    %p189 = por %p187, %p188
    %p190 = scmp.le.s32.totalorder 1, %s10
    %p191 = scmp.lt.s32.totalorder %s10, 11
    %p192 = pnand %p190, %p191
    %p193 = pneg %p192
    // Predicated region
    $region9: #{_conv_transpose3d_pallas.1} parent=5 // pred_check
      _
    $region10: #{_conv_transpose3d_pallas.1} parent=5 // pred_check_branch
      %195 = sbr.rel (%p192) target = $region12
    $region11: #{_conv_transpose3d_pallas.1} parent=5 // pred_region
      %s196 = ssub.s32 %s10, 1
      // Predicated region
      $region13: #{_conv_transpose3d_pallas.1} parent=11 // pred_check
        %p197 = pneg %p124
      $region14: #{_conv_transpose3d_pallas.1} parent=11 // pred_check_branch
        %199 = sbr.rel (%p197) target = $region16
      $region15: #{_conv_transpose3d_pallas.1} parent=11 // pred_region
        %p200 = scmp.lt.s32.totalorder %s22, 0
        %s201 = scalar_select %p200, %s22, 0
        %s202 = smul.addr %s201, 4
        %s203 = scalar_lea.vmem %s2, %s202
      $region16: #{_conv_transpose3d_pallas.1} parent=11 // pred_fallthru
        _
      // Predicated region
      $region17: #{_conv_transpose3d_pallas.1} parent=11 // pred_check
        %p204 = pneg %p150
      $region18: #{_conv_transpose3d_pallas.1} parent=11 // pred_check_branch
        %206 = sbr.rel (%p204) target = $region20
      $region19: #{_conv_transpose3d_pallas.1} parent=11 // pred_region
        %p207 = scmp.lt.s32.totalorder %s22, 0
        %s208 = scalar_select %p207, %s22, 0
        %s209 = scalar_lea.vmem %s3, %s208
      $region20: #{_conv_transpose3d_pallas.1} parent=11 // pred_fallthru
        _
    $region12: #{_conv_transpose3d_pallas.1} parent=5 // pred_fallthru
      _
    %p210 = scmp.lt.s32.totalorder %s10, 10
    // Predicated region
    $region21: #{_conv_transpose3d_pallas.1} parent=5 // pred_check
      %p211 = pneg %p210
    $region22: #{_conv_transpose3d_pallas.1} parent=5 // pred_check_branch
      %213 = sbr.rel (%p211) target = $region24
    $region23: #{_conv_transpose3d_pallas.1} parent=5 // pred_region
      // Predicated region
      $region25: #{_conv_transpose3d_pallas.1} parent=23 // pred_check
        %p214 = pneg %p60
      $region26: #{_conv_transpose3d_pallas.1} parent=23 // pred_check_branch
        %216 = sbr.rel (%p214) target = $region28
      $region27: #{_conv_transpose3d_pallas.1} parent=23 // pred_region
        %s217 = smul.u32 6, %s20
        %p218 = scmp.lt.s32.totalorder %s17, 1
        %s219 = scalar_select %p218, %s17, 1
        %p220 = scmp.lt.s32.totalorder %s19, 5
        %s221 = scalar_select %p220, %s19, 5
        %p222 = scmp.lt.s32.totalorder %s217, 5
        %s223 = scalar_select %p222, %s217, 5
        %s224 = smul.addr %s221, 6
        %s225 = sadd.s32 %s223, %s224
        %s226 = smul.addr %s219, 36
        %s227 = sadd.s32 %s225, %s226
        %s228 = smul.addr %s227, 4
        %s229 = scalar_lea.vmem %s0, %s228
        %s230 = smul.u32 6, %s20
      $region28: #{_conv_transpose3d_pallas.1} parent=23 // pred_fallthru
        _
      // Predicated region
      $region29: #{_conv_transpose3d_pallas.1} parent=23 // pred_check
        %p231 = pneg %p92
      $region30: #{_conv_transpose3d_pallas.1} parent=23 // pred_check_branch
        %233 = sbr.rel (%p231) target = $region32
      $region31: #{_conv_transpose3d_pallas.1} parent=23 // pred_region
        %s234 = sadd.s32 %s19, 1
        %s235 = smul.u32 6, %s20
        %p236 = scmp.lt.s32.totalorder %s17, 1
        %s237 = scalar_select %p236, %s17, 1
        %p238 = scmp.lt.s32.totalorder %s234, 5
        %s239 = scalar_select %p238, %s234, 5
        %p240 = scmp.lt.s32.totalorder %s235, 5
        %s241 = scalar_select %p240, %s235, 5
        %s242 = smul.addr %s239, 6
        %s243 = sadd.s32 %s241, %s242
        %s244 = smul.addr %s237, 36
        %s245 = sadd.s32 %s243, %s244
        %s246 = smul.addr %s245, 4
        %s247 = scalar_lea.vmem %s1, %s246
        %s248 = sadd.s32 %s19, 1
        %s249 = smul.u32 6, %s20
      $region32: #{_conv_transpose3d_pallas.1} parent=23 // pred_fallthru
        _
    $region24: #{_conv_transpose3d_pallas.1} parent=5 // pred_fallthru
      _
    %p250 = scmp.le.s32.totalorder 1, %s10
    %p251 = scmp.lt.s32.totalorder %s10, 11
    %p252 = pnand %p250, %p251
    %p253 = pneg %p252
    // Predicated region
    $region33: #{_conv_transpose3d_pallas.1} parent=5 // pred_check
      _
    $region34: #{_conv_transpose3d_pallas.1} parent=5 // pred_check_branch
      %255 = sbr.rel (%p252) target = $region36
    $region35: #{_conv_transpose3d_pallas.1} parent=5 // pred_region
      %s256 = ssub.s32 %s10, 1
      %s257 = smul.u32 6, %s24
      %p258 = scmp.lt.s32.totalorder %s21, 1
      %s259 = scalar_select %p258, %s21, 1
      %p260 = scmp.lt.s32.totalorder %s23, 5
      %s261 = scalar_select %p260, %s23, 5
      %p262 = scmp.lt.s32.totalorder %s257, 5
      %s263 = scalar_select %p262, %s257, 5
      %s264 = smul.addr %s261, 6
      %s265 = sadd.s32 %s263, %s264
      %s266 = smul.addr %s259, 36
      %s267 = sadd.s32 %s265, %s266
      %s268 = smul.addr %s267, 4
      %s269 = scalar_lea.vmem %s0, %s268
      %p270 = pneg %p66
      %p271 = pneg %p63
      %s272 = sadd.s32 %s23, 1
      %s273 = smul.u32 6, %s24
      %p274 = scmp.lt.s32.totalorder %s21, 1
      %s275 = scalar_select %p274, %s21, 1
      %p276 = scmp.lt.s32.totalorder %s272, 5
      %s277 = scalar_select %p276, %s272, 5
      %p278 = scmp.lt.s32.totalorder %s273, 5
      %s279 = scalar_select %p278, %s273, 5
      %s280 = smul.addr %s277, 6
      %s281 = sadd.s32 %s279, %s280
      %s282 = smul.addr %s275, 36
      %s283 = sadd.s32 %s281, %s282
      %s284 = smul.addr %s283, 4
      %s285 = scalar_lea.vmem %s1, %s284
      %p286 = pneg %p98
      %p287 = pneg %p95
      %p288 = scmp.lt.s32.totalorder %s22, 0
      %s289 = scalar_select %p288, %s22, 0
      %s290 = smul.addr %s289, 4
      %s291 = scalar_lea.vmem %s2, %s290
      %p292 = pneg %p124
      %p293 = pneg %p121
      %p294 = scmp.lt.s32.totalorder %s22, 0
      %s295 = scalar_select %p294, %s22, 0
      %s296 = scalar_lea.vmem %s3, %s295
      %p297 = pneg %p150
      %p298 = pneg %p147
      %p299 = pneg %p182
      %p300 = pneg %p179
      %s301 = smul.u32 6, %s24
      %p302 = scmp.lt.s32.totalorder %s21, 1
      %s303 = scalar_select %p302, %s21, 1
      %p304 = scmp.lt.s32.totalorder %s23, 4
      %s305 = scalar_select %p304, %s23, 4
      %p306 = scmp.lt.s32.totalorder %s301, 5
      %s307 = scalar_select %p306, %s301, 5
      %p308 = scmp.lt.s32.totalorder %s22, 0
      %s309 = scalar_select %p308, %s22, 0
      %s310 = sadd.s32 %s309, %s307
      %s311 = smul.addr %s305, 6
      %s312 = sadd.s32 %s310, %s311
      %s313 = smul.addr %s303, 30
      %s314 = sadd.s32 %s312, %s313
      %s315 = smul.addr %s314, 4
      %s316 = scalar_lea.vmem %s4, %s315
      %s317 = smul.u32 6, %s24
      %p318 = scmp.lt.s32.totalorder %s21, 1
      %s319 = scalar_select %p318, %s21, 1
      %p320 = scmp.lt.s32.totalorder %s23, 5
      %s321 = scalar_select %p320, %s23, 5
      %p322 = scmp.lt.s32.totalorder %s317, 5
      %s323 = scalar_select %p322, %s317, 5
      %s324 = smul.addr %s321, 6
      %s325 = sadd.s32 %s323, %s324
      %s326 = smul.addr %s319, 36
      %s327 = sadd.s32 %s325, %s326
      %s328 = smul.addr %s327, 4
      %s329 = scalar_lea.vmem %s0, %s328
      %s330 = smul.u32 6, %s24
      %s331 = sadd.s32 %s23, 1
      %s332 = smul.u32 6, %s24
      %p333 = scmp.lt.s32.totalorder %s21, 1
      %s334 = scalar_select %p333, %s21, 1
      %p335 = scmp.lt.s32.totalorder %s331, 5
      %s336 = scalar_select %p335, %s331, 5
      %p337 = scmp.lt.s32.totalorder %s332, 5
      %s338 = scalar_select %p337, %s332, 5
      %s339 = smul.addr %s336, 6
      %s340 = sadd.s32 %s338, %s339
      %s341 = smul.addr %s334, 36
      %s342 = sadd.s32 %s340, %s341
      %s343 = smul.addr %s342, 4
      %s344 = scalar_lea.vmem %s1, %s343
      %s345 = sadd.s32 %s23, 1
      %s346 = smul.u32 6, %s24
      %p347 = scmp.lt.s32.totalorder %s22, 0
      %s348 = scalar_select %p347, %s22, 0
      %s349 = smul.addr %s348, 4
      %s350 = scalar_lea.vmem %s2, %s349
      %p351 = scmp.lt.s32.totalorder %s22, 0
      %s352 = scalar_select %p351, %s22, 0
      %s353 = scalar_lea.vmem %s3, %s352
      %s354 = smul.u32 6, %s24
      %p355 = scmp.lt.s32.totalorder %s21, 1
      %s356 = scalar_select %p355, %s21, 1
      %p357 = scmp.lt.s32.totalorder %s23, 4
      %s358 = scalar_select %p357, %s23, 4
      %p359 = scmp.lt.s32.totalorder %s354, 5
      %s360 = scalar_select %p359, %s354, 5
      %p361 = scmp.lt.s32.totalorder %s22, 0
      %s362 = scalar_select %p361, %s22, 0
      %s363 = sadd.s32 %s362, %s360
      %s364 = smul.addr %s358, 6
      %s365 = sadd.s32 %s363, %s364
      %s366 = smul.addr %s356, 30
      %s367 = sadd.s32 %s365, %s366
      %s368 = smul.addr %s367, 4
      %s369 = scalar_lea.vmem %s4, %s368
      %s370 = smul.u32 6, %s24
      %v372 = vld [vmem:[%s329] sm:$0xf]
      %v373 = vld [vmem:[%s329 + $0x4] sm:$0xf]
      %v374 = vld [vmem:[%s329 + $0x8] sm:$0xf]
      %v375 = vld [vmem:[%s329 + $0xc] sm:$0xf]
      %v376 = vld [vmem:[%s329 + $0x10] sm:$0xf]
      %v377 = vld [vmem:[%s329 + $0x14] sm:$0xf]
      %v378 = vld [vmem:[%s350] sm:$0xf]
      %v379 = vld [vmem:[%s350 + $0x4] sm:$0xf]
      %v386 = vunpack.c.l.b16 %v372
      %v387 = vunpack.c.l.b16 %v373
      %v388 = vunpack.c.l.b16 %v374
      %v389 = vunpack.c.l.b16 %v375
      %v390 = vunpack.c.l.b16 %v376
      %v391 = vunpack.c.l.b16 %v377
      %v392 = vpack.c.b16 %v387, %v386
      %v393 = vpack.c.b16 %v389, %v388
      %v394 = vpack.c.b16 %v391, %v390
      %v397 = vunpack.c.l.b16 %v378
      %v398 = vunpack.c.l.b16 %v379
      %v399 = vpack.c.b16 %v398, %v397
      %vm401 = vcmask 130048
      %v403 = vsel %vm401, %v392, 0
      %v406 = vsel %vm401, %v393, 0
      %v409 = vsel %vm401, %v394, 0
      %411 = vmatprep.subr.bf16.mxu0 0
      %412 = vmatpush1.bf16.msra.mxu0 0
      %413 = vmatprep.subr.bf16.mxu0 0
      %414 = vmatpush1.bf16.msra.mxu0 0
      %415 = vmatprep.subr.bf16.mxu0 0
      %416 = vmatpush1.bf16.msra.mxu0 0
      %417 = vmatprep.subr.bf16.mxu0 0
      %418 = vmatpush1.bf16.msra.mxu0 0
      %419 = vmatprep.subr.bf16.mxu0 0
      %420 = vmatpush1.bf16.msra.mxu0 0
      %421 = vmatprep.subr.bf16.mxu0 0
      %422 = vmatpush1.bf16.msra.mxu0 0
      %423 = vmatprep.subr.bf16.mxu0 0
      %424 = vmatpush1.bf16.msra.mxu0 0
      %425 = vmatprep.subr.bf16.mxu0 0
      %426 = vmatpush1.bf16.msra.mxu0 %v399
      %427 = vmatprep.subr.bf16.mxu0 0
      %428 = vmatpush2.bf16.msra.mxu0 0
      %429 = vmatprep.subr.bf16.mxu0 0
      %430 = vmatpush2.bf16.msra.mxu0 0
      %431 = vmatprep.subr.bf16.mxu0 0
      %432 = vmatpush2.bf16.msra.mxu0 0
      %433 = vmatprep.subr.bf16.mxu0 0
      %434 = vmatpush2.bf16.msra.mxu0 0
      %435 = vmatprep.subr.bf16.mxu0 0
      %436 = vmatpush2.bf16.msra.mxu0 0
      %437 = vmatprep.subr.bf16.mxu0 0
      %438 = vmatpush2.bf16.msra.mxu0 0
      %439 = vmatprep.subr.bf16.mxu0 0
      %440 = vmatpush2.bf16.msra.mxu0 0
      %441 = vmatprep.subr.bf16.mxu0 0
      %442 = vmatpush2.bf16.msra.mxu0 0
      %443 = vmatprep.mubr.bf16.mxu0 0
      %444 = vmatmul.mubr.bf16.gmra.mxu0 %v403
      %v445 = vpop.f32.mrf.mxu0
      %v446 = vadd.f32 0.0, %v445
      %v447 = vpop.f32.mrf.mxu0
      %v448 = vpop.f32.mrf.mxu0
      %v449 = vadd.f32 0.0, %v448
      %v450 = vpop.f32.mrf.mxu0
      %451 = vmatprep.mubr.bf16.mxu0 0
      %452 = vmatmul.mubr.bf16.gmra.mxu0 %v406
      %v453 = vpop.f32.mrf.mxu0
      %v454 = vadd.f32 0.0, %v453
      %v455 = vpop.f32.mrf.mxu0
      %v456 = vpop.f32.mrf.mxu0
      %v457 = vadd.f32 0.0, %v456
      %v458 = vpop.f32.mrf.mxu0
      %459 = vmatprep.mubr.bf16.mxu0 0
      %460 = vmatmul.mubr.bf16.gmra.mxu0 %v409
      %v461 = vpop.f32.mrf.mxu0
      %v462 = vadd.f32 0.0, %v461
      %v463 = vpop.f32.mrf.mxu0
      %v464 = vpop.f32.mrf.mxu0
      %v465 = vadd.f32 0.0, %v464
      %v466 = vpop.f32.mrf.mxu0
      %467 = vdwg.mxu0
      %468 = vst [vmem:[#allocation2] sm:$0xff] %v446
      %469 = vst [vmem:[#allocation2 + $0x8] sm:$0xff] %v449
      %470 = vst [vmem:[#allocation2 + $0x10] sm:$0xff] %v454
      %471 = vst [vmem:[#allocation2 + $0x18] sm:$0xff] %v457
      %472 = vst [vmem:[#allocation2 + $0x20] sm:$0xff] %v462
      %473 = vst [vmem:[#allocation2 + $0x28] sm:$0xff] %v465
      %v474 = vld [vmem:[%s344] sm:$0xf]
      %v475 = vld [vmem:[%s344 + $0x4] sm:$0xf]
      %v476 = vld [vmem:[%s344 + $0x8] sm:$0xf]
      %v477 = vld [vmem:[%s344 + $0xc] sm:$0xf]
      %v478 = vld [vmem:[%s344 + $0x10] sm:$0xf]
      %v479 = vld [vmem:[%s344 + $0x14] sm:$0xf]
      %s480 = scalar_lea.vmem %s350, 8
      %v481 = vld [vmem:[%s480] sm:$0xf]
      %v482 = vld [vmem:[%s480 + $0x4] sm:$0xf]
      %v483 = vld [vmem:[%s353] sm:$0x1]
      %v485 = vlaneseq
      %v486 = vshrl.u32 %v485, 7
      %v487 = vsub.s32 0, %v486
      %v488 = vrot.slane %v483, %v487
      %v496 = vunpack.c.l.b16 %v474
      %v497 = vunpack.c.l.b16 %v475
      %v498 = vunpack.c.l.b16 %v476
      %v499 = vunpack.c.l.b16 %v477
      %v500 = vunpack.c.l.b16 %v478
      %v501 = vunpack.c.l.b16 %v479
      %v502 = vpack.c.b16 %v497, %v496
      %v503 = vpack.c.b16 %v499, %v498
      %v504 = vpack.c.b16 %v501, %v500
      %v507 = vunpack.c.l.b16 %v481
      %v508 = vunpack.c.l.b16 %v482
      %v509 = vpack.c.b16 %v508, %v507
      %v512 = vsel %vm401, %v502, 0
      %v515 = vsel %vm401, %v503, 0
      %v518 = vsel %vm401, %v504, 0
      %520 = vmatprep.subr.bf16.mxu0 0
      %521 = vmatpush1.bf16.msra.mxu0 0
      %522 = vmatprep.subr.bf16.mxu0 0
      %523 = vmatpush1.bf16.msra.mxu0 0
      %524 = vmatprep.subr.bf16.mxu0 0
      %525 = vmatpush1.bf16.msra.mxu0 0
      %526 = vmatprep.subr.bf16.mxu0 0
      %527 = vmatpush1.bf16.msra.mxu0 0
      %528 = vmatprep.subr.bf16.mxu0 0
      %529 = vmatpush1.bf16.msra.mxu0 0
      %530 = vmatprep.subr.bf16.mxu0 0
      %531 = vmatpush1.bf16.msra.mxu0 0
      %532 = vmatprep.subr.bf16.mxu0 0
      %533 = vmatpush1.bf16.msra.mxu0 0
      %534 = vmatprep.subr.bf16.mxu0 0
      %535 = vmatpush1.bf16.msra.mxu0 %v509
      %536 = vmatprep.subr.bf16.mxu0 0
      %537 = vmatpush2.bf16.msra.mxu0 0
      %538 = vmatprep.subr.bf16.mxu0 0
      %539 = vmatpush2.bf16.msra.mxu0 0
      %540 = vmatprep.subr.bf16.mxu0 0
      %541 = vmatpush2.bf16.msra.mxu0 0
      %542 = vmatprep.subr.bf16.mxu0 0
      %543 = vmatpush2.bf16.msra.mxu0 0
      %544 = vmatprep.subr.bf16.mxu0 0
      %545 = vmatpush2.bf16.msra.mxu0 0
      %546 = vmatprep.subr.bf16.mxu0 0
      %547 = vmatpush2.bf16.msra.mxu0 0
      %548 = vmatprep.subr.bf16.mxu0 0
      %549 = vmatpush2.bf16.msra.mxu0 0
      %550 = vmatprep.subr.bf16.mxu0 0
      %551 = vmatpush2.bf16.msra.mxu0 0
      %552 = vmatprep.mubr.bf16.mxu0 0
      %553 = vmatmul.mubr.bf16.gmra.mxu0 %v512
      %v554 = vpop.f32.mrf.mxu0
      %v555 = vadd.f32 %v488, %v554
      %v556 = vpop.f32.mrf.mxu0
      %v557 = vpop.f32.mrf.mxu0
      %v558 = vadd.f32 %v488, %v557
      %v559 = vpop.f32.mrf.mxu0
      %560 = vmatprep.mubr.bf16.mxu0 0
      %561 = vmatmul.mubr.bf16.gmra.mxu0 %v515
      %v562 = vpop.f32.mrf.mxu0
      %v563 = vadd.f32 %v488, %v562
      %v564 = vpop.f32.mrf.mxu0
      %v565 = vpop.f32.mrf.mxu0
      %v566 = vadd.f32 %v488, %v565
      %v567 = vpop.f32.mrf.mxu0
      %568 = vmatprep.mubr.bf16.mxu0 0
      %569 = vmatmul.mubr.bf16.gmra.mxu0 %v518
      %v570 = vpop.f32.mrf.mxu0
      %v571 = vadd.f32 %v488, %v570
      %v572 = vpop.f32.mrf.mxu0
      %v573 = vpop.f32.mrf.mxu0
      %v574 = vadd.f32 %v488, %v573
      %v575 = vpop.f32.mrf.mxu0
      %576 = vdwg.mxu0
      %v577 = vld [vmem:[#allocation2] sm:$0xff]
      %v578 = vld [vmem:[#allocation2 + $0x8] sm:$0xff]
      %v579 = vld [vmem:[#allocation2 + $0x10] sm:$0xff]
      %v580 = vld [vmem:[#allocation2 + $0x18] sm:$0xff]
      %v581 = vld [vmem:[#allocation2 + $0x20] sm:$0xff]
      %v582 = vld [vmem:[#allocation2 + $0x28] sm:$0xff]
      %v583 = vadd.f32 %v555, %v577
      %v584 = vadd.f32 %v558, %v578
      %v585 = vadd.f32 %v563, %v579
      %v586 = vadd.f32 %v566, %v580
      %v587 = vadd.f32 %v571, %v581
      %v588 = vadd.f32 %v574, %v582
      %v589 = vpack.c.bf16 %v583, %v583
      %v590 = vpack.c.bf16 %v584, %v584
      %v591 = vpack.c.bf16 %v585, %v585
      %v592 = vpack.c.bf16 %v586, %v586
      %v593 = vpack.c.bf16 %v587, %v587
      %v594 = vpack.c.bf16 %v588, %v588
      %595 = vst [vmem:[%s369] sm:$0xf] %v589
      %596 = vst [vmem:[%s369 + $0x4] sm:$0xf] %v590
      %597 = vst [vmem:[%s369 + $0x8] sm:$0xf] %v591
      %598 = vst [vmem:[%s369 + $0xc] sm:$0xf] %v592
      %599 = vst [vmem:[%s369 + $0x10] sm:$0xf] %v593
      %600 = vst [vmem:[%s369 + $0x14] sm:$0xf] %v594
      %s601 = smul.u32 6, %s24
      %p602 = scmp.lt.s32.totalorder %s21, 1
      %s603 = scalar_select %p602, %s21, 1
      %p604 = scmp.lt.s32.totalorder %s23, 4
      %s605 = scalar_select %p604, %s23, 4
      %p606 = scmp.lt.s32.totalorder %s601, 5
      %s607 = scalar_select %p606, %s601, 5
      %p608 = scmp.lt.s32.totalorder %s22, 0
      %s609 = scalar_select %p608, %s22, 0
      %s610 = sadd.s32 %s609, %s607
      %s611 = smul.addr %s605, 6
      %s612 = sadd.s32 %s610, %s611
      %s613 = smul.addr %s603, 30
      %s614 = sadd.s32 %s612, %s613
      %s615 = smul.addr %s614, 4
      %s616 = scalar_lea.vmem %s4, %s615
      // Predicated region
      $region37: #{_conv_transpose3d_pallas.1} parent=35 // pred_check
        %p617 = pneg %p179
      $region38: #{_conv_transpose3d_pallas.1} parent=35 // pred_check_branch
        %619 = sbr.rel (%p617) target = $region40
      $region39: #{_conv_transpose3d_pallas.1} parent=35 // pred_region
        %s620 = smul.u32 6, %s24
      $region40: #{_conv_transpose3d_pallas.1} parent=35 // pred_fallthru
        _
    $region36: #{_conv_transpose3d_pallas.1} parent=5 // pred_fallthru
      _
    %p621 = scmp.le.s32.totalorder 2, %s10
    // Predicated region
    $region41: #{_conv_transpose3d_pallas.1} parent=5 // pred_check
      %p622 = pneg %p621
    $region42: #{_conv_transpose3d_pallas.1} parent=5 // pred_check_branch
      %624 = sbr.rel (%p622) target = $region44
    $region43: #{_conv_transpose3d_pallas.1} parent=5 // pred_region
      %s625 = ssub.s32 %s10, 2
      // Predicated region
      $region45: #{_conv_transpose3d_pallas.1} parent=43 // pred_check
        %p626 = pneg %p185
      $region46: #{_conv_transpose3d_pallas.1} parent=43 // pred_check_branch
        %628 = sbr.rel (%p626) target = $region48
      $region47: #{_conv_transpose3d_pallas.1} parent=43 // pred_region
        %s629 = smul.u32 6, %s28
        %p630 = scmp.lt.s32.totalorder %s25, 1
        %s631 = scalar_select %p630, %s25, 1
        %p632 = scmp.lt.s32.totalorder %s27, 4
        %s633 = scalar_select %p632, %s27, 4
        %p634 = scmp.lt.s32.totalorder %s629, 5
        %s635 = scalar_select %p634, %s629, 5
        %p636 = scmp.lt.s32.totalorder %s26, 0
        %s637 = scalar_select %p636, %s26, 0
        %s638 = sadd.s32 %s637, %s635
        %s639 = smul.addr %s633, 6
        %s640 = sadd.s32 %s638, %s639
        %s641 = smul.addr %s631, 30
        %s642 = sadd.s32 %s640, %s641
        %s643 = smul.addr %s642, 4
        %s644 = scalar_lea.vmem %s4, %s643
      $region48: #{_conv_transpose3d_pallas.1} parent=43 // pred_fallthru
        _
    $region44: #{_conv_transpose3d_pallas.1} parent=5 // pred_fallthru
      _
  $region6: #{_conv_transpose3d_pallas.1} parent=0 // loop_footer
    %s14 = sadd.s32 1, %s10
  $region7: #{_conv_transpose3d_pallas.1} parent=0 // loop_footer_branch
    %9 = sbr.rel target = $region3
  $region8: #{_conv_transpose3d_pallas.1} parent=0 // loop_exit
    _

</llo_original>
